<compile_context>
chip_gen: v5e
topology: v5e:2x2
jax: 0.10.0
libtpu: 0.0.40
codegen_flags: <defaults>
</compile_context>

<pallas_src>
import functools

import jax
import jax.numpy as jnp
from jax import lax
from jax.experimental import pallas as pl
from jax.experimental.pallas import tpu as pltpu

# MXU operand dtype: bf16 operands + f32 accumulation. Set to jnp.float32 for bit-tight
# parity with the f32 PyTorch reference (at ~2-4x lower MXU rate / 2x HBM traffic).
MATMUL_DTYPE = jnp.bfloat16
# HBM dtype for pure-bandwidth intermediates (qp/kp/vp, attention context).
INTERMEDIATE_DTYPE = jnp.bfloat16

DEFAULT_ROW_TILE = 512  # rows per grid step for the row-tiled projection / fc kernels


# ----------------------------------------------------------------------------
# Small helpers: VMEM budgeting & tiling
# ----------------------------------------------------------------------------
def _bytes(shape, dtype):
    n = 1
    for s in shape:
        n *= int(s)
    return n * jnp.dtype(dtype).itemsize


def _vmem_cap_bytes():
    try:
        return int(pltpu.get_tpu_info().vmem_capacity_bytes)
    except Exception:
        return 64 * 1024 * 1024  # conservative: v7x per-TensorCore VMEM


def _compiler_params(dims, needed_bytes):
    """Explicit per-call VMEM limit derived from the actual block shapes."""
    cap = _vmem_cap_bytes()
    limit = int(needed_bytes) + (4 << 20)               # headroom for compiler scratch
    limit = max(limit, 16 << 20)
    limit = min(limit, max(cap - (4 << 20), 16 << 20))  # stay under physical VMEM
    return pltpu.CompilerParams(dimension_semantics=dims, vmem_limit_bytes=limit)


def _row_tile(n, preferred=DEFAULT_ROW_TILE):
    if n <= preferred:
        return n                          # block == full dim, always legal
    return max(8, (preferred // 8) * 8)   # multiple of 8 sublanes; edge block is masked


# ----------------------------------------------------------------------------
# Kernel 1a: fused Q/K/V projections (distinct q/k/v activations), row-tiled.
#            y = x @ W_t + b   (W_t pre-transposed (d_in, d_out), bf16)
# ----------------------------------------------------------------------------
def _qkv_proj_kernel(q_ref, k_ref, v_ref, wq_ref, wk_ref, wv_ref,
                     bq_ref, bk_ref, bv_ref, qo_ref, ko_ref, vo_ref):
    def proj(x_ref, w_ref, b_ref, o_ref):
        x = x_ref[...].astype(MATMUL_DTYPE)                      # (TM, d_model)
        y = jnp.dot(x, w_ref[...], preferred_element_type=jnp.float32) + b_ref[...]
        o_ref[...] = y.astype(o_ref.dtype)

    proj(q_ref, wq_ref, bq_ref, qo_ref)
    proj(k_ref, wk_ref, bk_ref, ko_ref)
    proj(v_ref, wv_ref, bv_ref, vo_ref)


def fused_qkv_projection(q2, k2, v2, wq_t, wk_t, wv_t, bq, bk, bv,
                         out_dtype=INTERMEDIATE_DTYPE):
    """q2/k2/v2: (N, d_model); weights pre-transposed (d_model, d_out) in bf16."""
    N, d_model = q2.shape
    d_qk = wq_t.shape[1]
    d_vv = wv_t.shape[1]
    tm = _row_tile(N)

    def rows(d):
        return pl.BlockSpec((tm, d), lambda i: (i, 0))

    def resident(shape):
        return pl.BlockSpec(shape, lambda i: (0, 0))

    needed = 2 * (3 * _bytes((tm, d_model), q2.dtype)
                  + 2 * _bytes((tm, d_qk), out_dtype) + _bytes((tm, d_vv), out_dtype)
                  + 2 * _bytes((d_model, d_qk), wq_t.dtype)
                  + _bytes((d_model, d_vv), wv_t.dtype)
                  + 2 * _bytes((1, d_qk), jnp.float32) + _bytes((1, d_vv), jnp.float32))

    return pl.pallas_call(
        _qkv_proj_kernel,
        out_shape=(
            jax.ShapeDtypeStruct((N, d_qk), out_dtype),
            jax.ShapeDtypeStruct((N, d_qk), out_dtype),
            jax.ShapeDtypeStruct((N, d_vv), out_dtype),
        ),
        grid=(pl.cdiv(N, tm),),
        in_specs=[
            rows(d_model), rows(d_model), rows(d_model),
            resident((d_model, d_qk)), resident((d_model, d_qk)), resident((d_model, d_vv)),
            resident((1, d_qk)), resident((1, d_qk)), resident((1, d_vv)),
        ],
        out_specs=(rows(d_qk), rows(d_qk), rows(d_vv)),
        compiler_params=_compiler_params(("parallel",), needed),
    )(q2, k2, v2, wq_t, wk_t, wv_t,
      bq.reshape(1, -1), bk.reshape(1, -1), bv.reshape(1, -1))


# ----------------------------------------------------------------------------
# Kernel 1b: self-attention fast path (q is k is v): ONE matmul against the
#            concatenated (d_model, 2*Hdk + Hdv) weight; activation rows read once.
# ----------------------------------------------------------------------------
def _qkv_shared_kernel(x_ref, w_ref, b_ref, qo_ref, ko_ref, vo_ref, *, d_qk, d_vv):
    x = x_ref[...].astype(MATMUL_DTYPE)                          # (TM, d_model)
    y = jnp.dot(x, w_ref[...], preferred_element_type=jnp.float32) + b_ref[...]
    qo_ref[...] = y[:, :d_qk].astype(qo_ref.dtype)
    ko_ref[...] = y[:, d_qk:2 * d_qk].astype(ko_ref.dtype)
    vo_ref[...] = y[:, 2 * d_qk:2 * d_qk + d_vv].astype(vo_ref.dtype)


def fused_qkv_projection_shared(x2, w_qkv_t, b_qkv, d_qk, d_vv,
                                out_dtype=INTERMEDIATE_DTYPE):
    N, d_model = x2.shape
    d_tot = w_qkv_t.shape[1]
    tm = _row_tile(N)
    kern = functools.partial(_qkv_shared_kernel, d_qk=d_qk, d_vv=d_vv)

    needed = 2 * (_bytes((tm, d_model), x2.dtype)
                  + 2 * _bytes((tm, d_qk), out_dtype) + _bytes((tm, d_vv), out_dtype)
                  + _bytes((d_model, d_tot), w_qkv_t.dtype)
                  + _bytes((1, d_tot), jnp.float32))

    return pl.pallas_call(
        kern,
        out_shape=(
            jax.ShapeDtypeStruct((N, d_qk), out_dtype),
            jax.ShapeDtypeStruct((N, d_qk), out_dtype),
            jax.ShapeDtypeStruct((N, d_vv), out_dtype),
        ),
        grid=(pl.cdiv(N, tm),),
        in_specs=[
            pl.BlockSpec((tm, d_model), lambda i: (i, 0)),
            pl.BlockSpec((d_model, d_tot), lambda i: (0, 0)),
            pl.BlockSpec((1, d_tot), lambda i: (0, 0)),
        ],
        out_specs=(
            pl.BlockSpec((tm, d_qk), lambda i: (i, 0)),
            pl.BlockSpec((tm, d_qk), lambda i: (i, 0)),
            pl.BlockSpec((tm, d_vv), lambda i: (i, 0)),
        ),
        compiler_params=_compiler_params(("parallel",), needed),
    )(x2, w_qkv_t, b_qkv.reshape(1, -1))


# ----------------------------------------------------------------------------
# Kernel 2: generic row-tiled linear (fallback for cross-attention, len_q != len_k)
# ----------------------------------------------------------------------------
def _linear_kernel(x_ref, w_ref, b_ref, o_ref):
    x = x_ref[...].astype(MATMUL_DTYPE)
    o_ref[...] = (jnp.dot(x, w_ref[...], preferred_element_type=jnp.float32)
                  + b_ref[...]).astype(o_ref.dtype)


def linear(x, w_t, b, out_dtype=INTERMEDIATE_DTYPE):
    N, d_in = x.shape
    d_out = w_t.shape[1]
    tm = _row_tile(N)
    needed = 2 * (_bytes((tm, d_in), x.dtype) + _bytes((tm, d_out), out_dtype)
                  + _bytes((d_in, d_out), w_t.dtype) + _bytes((1, d_out), jnp.float32))
    return pl.pallas_call(
        _linear_kernel,
        out_shape=jax.ShapeDtypeStruct((N, d_out), out_dtype),
        grid=(pl.cdiv(N, tm),),
        in_specs=[
            pl.BlockSpec((tm, d_in), lambda i: (i, 0)),
            pl.BlockSpec((d_in, d_out), lambda i: (0, 0)),
            pl.BlockSpec((1, d_out), lambda i: (0, 0)),
        ],
        out_specs=pl.BlockSpec((tm, d_out), lambda i: (i, 0)),
        compiler_params=_compiler_params(("parallel",), needed),
    )(x, w_t, b.reshape(1, -1))


# ----------------------------------------------------------------------------
# Kernel 3: scaled dot-product attention
#   grid = (sz_b, Lq tiles); per step: one (tq, Lk) slab of one batch element, all heads.
#   Per-head outputs go into a VMEM scratch accumulator; one lane-dense store at the end.
# ----------------------------------------------------------------------------
def _mha_sdpa_kernel(q_ref, k_ref, v_ref, o_ref, attn_ref, acc_ref, *,
                     n_head, d_k, d_v, temperature):
    # q_ref: (1, tq, H*Dk)  k_ref: (1, Lk, H*Dk)  v_ref: (1, Lk, H*Dv)
    # o_ref: (1, tq, H*Dv)  attn_ref: (H, 1, tq, Lk)  acc_ref: (tq, H*Dv) f32 scratch
    inv_t = 1.0 / float(temperature)
    qb = q_ref[0].astype(MATMUL_DTYPE)
    kb = k_ref[0].astype(MATMUL_DTYPE)
    vb = v_ref[0].astype(MATMUL_DTYPE)

    for h in range(n_head):                      # static unroll; plain 2-D MXU dots
        q = qb[:, h * d_k:(h + 1) * d_k]         # (tq, Dk)
        k = kb[:, h * d_k:(h + 1) * d_k]         # (Lk, Dk)
        v = vb[:, h * d_v:(h + 1) * d_v]         # (Lk, Dv)
        # contract the last dims directly (no in-kernel transpose)
        s = lax.dot_general(q, k, (((1,), (1,)), ((), ())),
                            preferred_element_type=jnp.float32) * inv_t   # (tq, Lk)
        # numerically-stable softmax over keys (== torch.Softmax(dim=2)), f32 math
        s = s - jnp.max(s, axis=-1, keepdims=True)
        e = jnp.exp(s)
        p = e * pl.reciprocal(jnp.sum(e, axis=-1, keepdims=True), approx=True)
        attn_ref[h, 0] = p.astype(attn_ref.dtype)
        acc_ref[:, h * d_v:(h + 1) * d_v] = jnp.dot(
            p.astype(MATMUL_DTYPE), v, preferred_element_type=jnp.float32)

    # single lane-dense (tq, H*Dv) store — matches torch's permute(1,2,0,3).view layout
    o_ref[0] = acc_ref[...].astype(o_ref.dtype)


def _choose_q_tile(len_q, len_k, n_head, d_k, d_v, io_dtype, attn_dtype, budget):
    """Largest Lq tile whose per-step (double-buffered) footprint fits the VMEM budget."""
    io_b = jnp.dtype(io_dtype).itemsize
    at_b = jnp.dtype(attn_dtype).itemsize

    def per_step(tq):
        b = 2 * (tq * n_head * d_k * io_b          # q block
                 + len_k * n_head * d_k * io_b     # k block (full Lk, resident per batch)
                 + len_k * n_head * d_v * io_b     # v block
                 + tq * n_head * d_v * io_b        # context output block
                 + n_head * tq * len_k * at_b)     # attn output block
        return b + tq * n_head * d_v * 4           # f32 scratch accumulator

    tq = len_q if len_q <= 512 else 512
    while per_step(tq) > budget and tq > 8:
        tq = max(8, ((tq // 2) // 8) * 8)
    return tq, per_step(tq)


def multi_head_sdpa(qp3, kp3, vp3, *, n_head, d_k, d_v, temperature,
                    attn_dtype=jnp.bfloat16, out_dtype=INTERMEDIATE_DTYPE):
    """qp3: (sz_b, Lq, H*Dk), kp3/vp3: (sz_b, Lk, H*Dk / H*Dv).
    Returns out: (sz_b, Lq, H*Dv) and attn: (H*sz_b, Lq, Lk) (head-major, like torch)."""
    sz_b, len_q, _ = qp3.shape
    _, len_k, _ = kp3.shape

    budget = max(_vmem_cap_bytes() - (12 << 20), 16 << 20)
    tq, per_step = _choose_q_tile(len_q, len_k, n_head, d_k, d_v,
                                  qp3.dtype, attn_dtype, budget)

    kern = functools.partial(_mha_sdpa_kernel, n_head=n_head, d_k=d_k, d_v=d_v,
                             temperature=temperature)
    out, attn4 = pl.pallas_call(
        kern,
        out_shape=(
            jax.ShapeDtypeStruct((sz_b, len_q, n_head * d_v), out_dtype),
            jax.ShapeDtypeStruct((n_head, sz_b, len_q, len_k), attn_dtype),
        ),
        grid=(sz_b, pl.cdiv(len_q, tq)),
        in_specs=[
            pl.BlockSpec((1, tq, n_head * d_k), lambda b, i: (b, i, 0)),
            pl.BlockSpec((1, len_k, n_head * d_k), lambda b, i: (b, 0, 0)),
            pl.BlockSpec((1, len_k, n_head * d_v), lambda b, i: (b, 0, 0)),
        ],
        out_specs=(
            pl.BlockSpec((1, tq, n_head * d_v), lambda b, i: (b, i, 0)),
            pl.BlockSpec((n_head, 1, tq, len_k), lambda b, i: (0, b, i, 0)),
        ),
        scratch_shapes=[pltpu.VMEM((tq, n_head * d_v), jnp.float32)],
        compiler_params=_compiler_params(("parallel", "parallel"), per_step),
    )(qp3, kp3, vp3)
    # (H, sz_b, Lq, Lk) -> (H*sz_b, Lq, Lk): contiguous reshape, no transpose / HBM pass.
    return out, attn4.reshape(n_head * sz_b, len_q, len_k)


# ----------------------------------------------------------------------------
# Kernel 4: output projection + (residual | relu) + LayerNorm, row-tiled.
#   Two variants so the relu (use_star) path never DMAs the unused residual.
# ----------------------------------------------------------------------------
def _ln(y, g, beta, out_dtype):
    mu = jnp.mean(y, axis=-1, keepdims=True)
    var = jnp.mean(jnp.square(y - mu), axis=-1, keepdims=True)   # biased, eps=1e-5 (torch)
    return ((y - mu) * lax.rsqrt(var + 1e-5) * g + beta).astype(out_dtype)


def _out_proj_res_ln_kernel(x_ref, res_ref, w_ref, b_ref, g_ref, beta_ref, o_ref):
    x = x_ref[...].astype(MATMUL_DTYPE)                          # (TM, H*Dv)
    y = jnp.dot(x, w_ref[...], preferred_element_type=jnp.float32) + b_ref[...]
    y = y + res_ref[...]                                         # fc(out) + residual
    o_ref[...] = _ln(y, g_ref[...], beta_ref[...], o_ref.dtype)


def _out_proj_relu_ln_kernel(x_ref, w_ref, b_ref, g_ref, beta_ref, o_ref):
    x = x_ref[...].astype(MATMUL_DTYPE)
    y = jnp.dot(x, w_ref[...], preferred_element_type=jnp.float32) + b_ref[...]
    y = jnp.maximum(y, 0.0)                                      # relu(fc(out)); no residual
    o_ref[...] = _ln(y, g_ref[...], beta_ref[...], o_ref.dtype)


def out_proj_layernorm(x, residual, w_t, b, gamma, beta, *, use_star=False,
                       out_dtype=jnp.float32):
    N, d_in = x.shape
    d_model = w_t.shape[1]
    tm = _row_tile(N)

    def rows(d):
        return pl.BlockSpec((tm, d), lambda i: (i, 0))

    def resident(shape):
        return pl.BlockSpec(shape, lambda i: (0, 0))

    needed = 2 * (_bytes((tm, d_in), x.dtype) + _bytes((tm, d_model), out_dtype)
                  + _bytes((d_in, d_model), w_t.dtype)
                  + 3 * _bytes((1, d_model), jnp.float32))

    args = [x]
    in_specs = [rows(d_in)]
    if use_star:
        kern = _out_proj_relu_ln_kernel
    else:
        kern = _out_proj_res_ln_kernel
        args.append(residual)
        in_specs.append(rows(d_model))
        needed += 2 * _bytes((tm, d_model), residual.dtype)
    args += [w_t, b.reshape(1, d_model), gamma.reshape(1, d_model), beta.reshape(1, d_model)]
    in_specs += [resident((d_in, d_model)), resident((1, d_model)),
                 resident((1, d_model)), resident((1, d_model))]

    return pl.pallas_call(
        kern,
        out_shape=jax.ShapeDtypeStruct((N, d_model), out_dtype),
        grid=(pl.cdiv(N, tm),),
        in_specs=in_specs,
        out_specs=rows(d_model),
        compiler_params=_compiler_params(("parallel",), needed),
    )(*args)


# ----------------------------------------------------------------------------
# Parameters (mirrors the PyTorch __init__ inits; weights stored pre-transposed
# (d_in, d_out) and pre-cast to the MXU operand dtype; biases/LN params stay f32)
# ----------------------------------------------------------------------------
def init_params(key, n_head, d_model, d_k, d_v, weight_dtype=MATMUL_DTYPE):
    ks = jax.random.split(key, 8)
    std_qk = (2.0 / (d_model + d_k)) ** 0.5
    std_v = (2.0 / (d_model + d_v)) ** 0.5
    std_fc = (2.0 / (n_head * d_v + d_model)) ** 0.5        # xavier_normal for fc

    w_qs = jax.random.normal(ks[0], (d_model, n_head * d_k), jnp.float32) * std_qk
    w_ks = jax.random.normal(ks[2], (d_model, n_head * d_k), jnp.float32) * std_qk
    w_vs = jax.random.normal(ks[4], (d_model, n_head * d_v), jnp.float32) * std_v
    b_qs = jax.random.normal(ks[1], (n_head * d_k,), jnp.float32) * 0.02
    b_ks = jax.random.normal(ks[3], (n_head * d_k,), jnp.float32) * 0.02
    b_vs = jax.random.normal(ks[5], (n_head * d_v,), jnp.float32) * 0.02

    return {
        "w_qs_wt": w_qs.astype(weight_dtype),
        "w_ks_wt": w_ks.astype(weight_dtype),
        "w_vs_wt": w_vs.astype(weight_dtype),
        "w_qs_b": b_qs, "w_ks_b": b_ks, "w_vs_b": b_vs,
        # concatenated weights for the self-attention (q is k is v) single-matmul path
        "w_qkv_wt": jnp.concatenate([w_qs, w_ks, w_vs], axis=1).astype(weight_dtype),
        "w_qkv_b": jnp.concatenate([b_qs, b_ks, b_vs], axis=0),
        "fc_wt": (jax.random.normal(ks[6], (n_head * d_v, d_model), jnp.float32)
                  * std_fc).astype(weight_dtype),
        "fc_b": jax.random.normal(ks[7], (d_model,), jnp.float32) * 0.02,
        "ln_gamma": jnp.ones((d_model,), jnp.float32),
        "ln_beta": jnp.zeros((d_model,), jnp.float32),
    }


# ----------------------------------------------------------------------------
# Full forward pass
# ----------------------------------------------------------------------------
def multi_head_attention(params, q, k, v, n_head, d_k, d_v, use_star=False,
                         mask=None, attn_dtype=jnp.bfloat16):
    # TODO(synk): attention mask (masked_fill with -inf) not implemented; this module's
    #             exercised path calls forward with mask=None.
    assert mask is None, "mask path not implemented"
    sz_b, len_q, d_model = q.shape
    _, len_k, _ = k.shape
    _, len_v, _ = v.shape
    residual = q

    q2 = q.reshape(sz_b * len_q, d_model)
    k2 = k.reshape(sz_b * len_k, d_model)
    v2 = v.reshape(sz_b * len_v, d_model)

    if q is k and k is v:
        # self-attention: one matmul per row tile against the concatenated weight
        qp, kp, vp = fused_qkv_projection_shared(
            q2, params["w_qkv_wt"], params["w_qkv_b"], n_head * d_k, n_head * d_v)
    elif len_q == len_k == len_v:
        # one fused row-tiled pallas_call: q/k/v DMA'd and projected in the same pipeline
        qp, kp, vp = fused_qkv_projection(
            q2, k2, v2,
            params["w_qs_wt"], params["w_ks_wt"], params["w_vs_wt"],
            params["w_qs_b"], params["w_ks_b"], params["w_vs_b"])
    else:
        qp = linear(q2, params["w_qs_wt"], params["w_qs_b"])
        kp = linear(k2, params["w_ks_wt"], params["w_ks_b"])
        vp = linear(v2, params["w_vs_wt"], params["w_vs_b"])

    # contiguous (free) reshapes; head selection happens inside the SDPA kernel, so no
    # host-side permute(2,0,1,3)/(1,2,0,3) HBM round trips are needed.
    qp3 = qp.reshape(sz_b, len_q, n_head * d_k)
    kp3 = kp.reshape(sz_b, len_k, n_head * d_k)
    vp3 = vp.reshape(sz_b, len_v, n_head * d_v)

    temperature = float(d_k) ** 0.5
    out_c, attn = multi_head_sdpa(qp3, kp3, vp3, n_head=n_head, d_k=d_k, d_v=d_v,
                                  temperature=temperature, attn_dtype=attn_dtype)

    out = out_proj_layernorm(
        out_c.reshape(sz_b * len_q, n_head * d_v),
        residual.reshape(sz_b * len_q, d_model),
        params["fc_wt"], params["fc_b"], params["ln_gamma"], params["ln_beta"],
        use_star=use_star,
    ).reshape(sz_b, len_q, d_model)

    return out, attn


if __name__ == "__main__":
    # Small shapes consistent with the module
    n_head, d_model, d_k, d_v = 4, 32, 8, 8
    sz_b, seq = 2, 8

    key = jax.random.PRNGKey(0)
    kp_, kq, kk, kv = jax.random.split(key, 4)
    params = init_params(kp_, n_head, d_model, d_k, d_v)

    q = jax.random.normal(kq, (sz_b, seq, d_model), jnp.float32)
    k = jax.random.normal(kk, (sz_b, seq, d_model), jnp.float32)
    v = jax.random.normal(kv, (sz_b, seq, d_model), jnp.float32)

    # cross-style call (distinct q/k/v): fused 3-projection path + residual LayerNorm
    out, attn = multi_head_attention(params, q, k, v, n_head, d_k, d_v)
    # self-attention call (q is k is v): single-matmul QKV path + relu (use_star) path
    out_sa, attn_sa = multi_head_attention(params, q, q, q, n_head, d_k, d_v,
                                           use_star=True)
    jax.block_until_ready((out, attn, out_sa, attn_sa))

    assert out.shape == (sz_b, seq, d_model)
    assert attn.shape == (n_head * sz_b, seq, seq)
    assert out_sa.shape == (sz_b, seq, d_model)
    assert attn_sa.shape == (n_head * sz_b, seq, seq)
    assert bool(jnp.all(jnp.isfinite(out)))
    assert bool(jnp.all(jnp.isfinite(out_sa)))
    assert bool(jnp.all(jnp.isfinite(attn.astype(jnp.float32))))
    # softmax rows sum to ~1 (bf16 attn + approx reciprocal => loose tolerance)
    rowsum = jnp.sum(attn.astype(jnp.float32), axis=-1)
    assert bool(jnp.allclose(rowsum, 1.0, atol=2e-2))
    print("KERNEL_OK")
</pallas_src>

<mosaic_0001>
module attributes {stable_mosaic.version = 11 : i64} {
  func.func @_qkv_proj_kernel(%arg0: i32, %arg1: memref<16x32xf32, #tpu.memory_space<vmem>>, %arg2: memref<16x32xf32, #tpu.memory_space<vmem>>, %arg3: memref<16x32xf32, #tpu.memory_space<vmem>>, %arg4: memref<32x32xbf16, #tpu.memory_space<vmem>>, %arg5: memref<32x32xbf16, #tpu.memory_space<vmem>>, %arg6: memref<32x32xbf16, #tpu.memory_space<vmem>>, %arg7: memref<1x32xf32, #tpu.memory_space<vmem>>, %arg8: memref<1x32xf32, #tpu.memory_space<vmem>>, %arg9: memref<1x32xf32, #tpu.memory_space<vmem>>, %arg10: memref<16x32xbf16, #tpu.memory_space<vmem>>, %arg11: memref<16x32xbf16, #tpu.memory_space<vmem>>, %arg12: memref<16x32xbf16, #tpu.memory_space<vmem>>) attributes {dimension_semantics = [#tpu.dimension_semantics<parallel>], iteration_bounds = array<i64: 1>, scalar_prefetch = 0 : i64, scratch_operands = 0 : i64, tpu.core_type = #tpu.core_type<tc>, window_params = [{transform_indices = @transform_0, window_bounds = array<i64: 16, 32>}, {transform_indices = @transform_1, window_bounds = array<i64: 16, 32>}, {transform_indices = @transform_2, window_bounds = array<i64: 16, 32>}, {pipeline_mode = #tpu.pipeline_mode<synchronous>, transform_indices = @transform_3, window_bounds = array<i64: 32, 32>}, {pipeline_mode = #tpu.pipeline_mode<synchronous>, transform_indices = @transform_4, window_bounds = array<i64: 32, 32>}, {pipeline_mode = #tpu.pipeline_mode<synchronous>, transform_indices = @transform_5, window_bounds = array<i64: 32, 32>}, {pipeline_mode = #tpu.pipeline_mode<synchronous>, transform_indices = @transform_6, window_bounds = array<i64: 1, 32>}, {pipeline_mode = #tpu.pipeline_mode<synchronous>, transform_indices = @transform_7, window_bounds = array<i64: 1, 32>}, {pipeline_mode = #tpu.pipeline_mode<synchronous>, transform_indices = @transform_8, window_bounds = array<i64: 1, 32>}, {transform_indices = @transform_9, window_bounds = array<i64: 16, 32>}, {transform_indices = @transform_10, window_bounds = array<i64: 16, 32>}, {transform_indices = @transform_11, window_bounds = array<i64: 16, 32>}]} {
    %c0 = arith.constant 0 : index
    %c0_0 = arith.constant 0 : index
    %0 = vector.load %arg1[%c0, %c0_0] : memref<16x32xf32, #tpu.memory_space<vmem>>, vector<16x32xf32>
    %1 = arith.truncf %0 : vector<16x32xf32> to vector<16x32xbf16>
    %c0_1 = arith.constant 0 : index
    %c0_2 = arith.constant 0 : index
    %2 = vector.load %arg4[%c0_1, %c0_2] : memref<32x32xbf16, #tpu.memory_space<vmem>>, vector<32x32xbf16>
    %cst = arith.constant dense<0.000000e+00> : vector<16x32xf32>
    %3 = tpu.matmul %1, %2, %cst {dimension_numbers = #tpu.dot_dimension_numbers<[1], [0], [0], [1], [0, 0, 1, 1], [], []>} : vector<16x32xbf16>, vector<32x32xbf16>, vector<16x32xf32> -> vector<16x32xf32>
    %c0_3 = arith.constant 0 : index
    %c0_4 = arith.constant 0 : index
    %4 = vector.load %arg7[%c0_3, %c0_4] : memref<1x32xf32, #tpu.memory_space<vmem>>, vector<1x32xf32>
    %5 = vector.broadcast %4 : vector<1x32xf32> to vector<16x32xf32>
    %6 = arith.addf %3, %5 : vector<16x32xf32>
    %7 = arith.truncf %6 : vector<16x32xf32> to vector<16x32xbf16>
    %c0_5 = arith.constant 0 : index
    %c0_6 = arith.constant 0 : index
    %8 = vector.load %arg10[%c0_5, %c0_6] : memref<16x32xbf16, #tpu.memory_space<vmem>>, vector<16x32xbf16>
    tpu.vector_store %arg10[%c0_5, %c0_6], %7 {strides = array<i32>} : memref<16x32xbf16, #tpu.memory_space<vmem>>, vector<16x32xbf16>,
    %c0_7 = arith.constant 0 : index
    %c0_8 = arith.constant 0 : index
    %9 = vector.load %arg2[%c0_7, %c0_8] : memref<16x32xf32, #tpu.memory_space<vmem>>, vector<16x32xf32>
    %10 = arith.truncf %9 : vector<16x32xf32> to vector<16x32xbf16>
    %c0_9 = arith.constant 0 : index
    %c0_10 = arith.constant 0 : index
    %11 = vector.load %arg5[%c0_9, %c0_10] : memref<32x32xbf16, #tpu.memory_space<vmem>>, vector<32x32xbf16>
    %cst_11 = arith.constant dense<0.000000e+00> : vector<16x32xf32>
    %12 = tpu.matmul %10, %11, %cst_11 {dimension_numbers = #tpu.dot_dimension_numbers<[1], [0], [0], [1], [0, 0, 1, 1], [], []>} : vector<16x32xbf16>, vector<32x32xbf16>, vector<16x32xf32> -> vector<16x32xf32>
    %c0_12 = arith.constant 0 : index
    %c0_13 = arith.constant 0 : index
    %13 = vector.load %arg8[%c0_12, %c0_13] : memref<1x32xf32, #tpu.memory_space<vmem>>, vector<1x32xf32>
    %14 = vector.broadcast %13 : vector<1x32xf32> to vector<16x32xf32>
    %15 = arith.addf %12, %14 : vector<16x32xf32>
    %16 = arith.truncf %15 : vector<16x32xf32> to vector<16x32xbf16>
    %c0_14 = arith.constant 0 : index
    %c0_15 = arith.constant 0 : index
    %17 = vector.load %arg11[%c0_14, %c0_15] : memref<16x32xbf16, #tpu.memory_space<vmem>>, vector<16x32xbf16>
    tpu.vector_store %arg11[%c0_14, %c0_15], %16 {strides = array<i32>} : memref<16x32xbf16, #tpu.memory_space<vmem>>, vector<16x32xbf16>,
    %c0_16 = arith.constant 0 : index
    %c0_17 = arith.constant 0 : index
    %18 = vector.load %arg3[%c0_16, %c0_17] : memref<16x32xf32, #tpu.memory_space<vmem>>, vector<16x32xf32>
    %19 = arith.truncf %18 : vector<16x32xf32> to vector<16x32xbf16>
    %c0_18 = arith.constant 0 : index
    %c0_19 = arith.constant 0 : index
    %20 = vector.load %arg6[%c0_18, %c0_19] : memref<32x32xbf16, #tpu.memory_space<vmem>>, vector<32x32xbf16>
    %cst_20 = arith.constant dense<0.000000e+00> : vector<16x32xf32>
    %21 = tpu.matmul %19, %20, %cst_20 {dimension_numbers = #tpu.dot_dimension_numbers<[1], [0], [0], [1], [0, 0, 1, 1], [], []>} : vector<16x32xbf16>, vector<32x32xbf16>, vector<16x32xf32> -> vector<16x32xf32>
    %c0_21 = arith.constant 0 : index
    %c0_22 = arith.constant 0 : index
    %22 = vector.load %arg9[%c0_21, %c0_22] : memref<1x32xf32, #tpu.memory_space<vmem>>, vector<1x32xf32>
    %23 = vector.broadcast %22 : vector<1x32xf32> to vector<16x32xf32>
    %24 = arith.addf %21, %23 : vector<16x32xf32>
    %25 = arith.truncf %24 : vector<16x32xf32> to vector<16x32xbf16>
    %c0_23 = arith.constant 0 : index
    %c0_24 = arith.constant 0 : index
    %26 = vector.load %arg12[%c0_23, %c0_24] : memref<16x32xbf16, #tpu.memory_space<vmem>>, vector<16x32xbf16>
    tpu.vector_store %arg12[%c0_23, %c0_24], %25 {strides = array<i32>} : memref<16x32xbf16, #tpu.memory_space<vmem>>, vector<16x32xbf16>,
    return
  }
  func.func @transform_0(%arg0: i32) -> (i32, i32) {
    %c0_i32 = arith.constant 0 : i32
    %c0_i32_0 = arith.constant 0 : i32
    return %arg0, %c0_i32 : i32, i32
  }
  func.func @transform_1(%arg0: i32) -> (i32, i32) {
    %c0_i32 = arith.constant 0 : i32
    %c0_i32_0 = arith.constant 0 : i32
    return %arg0, %c0_i32 : i32, i32
  }
  func.func @transform_2(%arg0: i32) -> (i32, i32) {
    %c0_i32 = arith.constant 0 : i32
    %c0_i32_0 = arith.constant 0 : i32
    return %arg0, %c0_i32 : i32, i32
  }
  func.func @transform_3(%arg0: i32) -> (i32, i32) {
    %c0_i32 = arith.constant 0 : i32
    %c0_i32_0 = arith.constant 0 : i32
    %c0_i32_1 = arith.constant 0 : i32
    return %c0_i32, %c0_i32_0 : i32, i32
  }
  func.func @transform_4(%arg0: i32) -> (i32, i32) {
    %c0_i32 = arith.constant 0 : i32
    %c0_i32_0 = arith.constant 0 : i32
    %c0_i32_1 = arith.constant 0 : i32
    return %c0_i32, %c0_i32_0 : i32, i32
  }
  func.func @transform_5(%arg0: i32) -> (i32, i32) {
    %c0_i32 = arith.constant 0 : i32
    %c0_i32_0 = arith.constant 0 : i32
    %c0_i32_1 = arith.constant 0 : i32
    return %c0_i32, %c0_i32_0 : i32, i32
  }
  func.func @transform_6(%arg0: i32) -> (i32, i32) {
    %c0_i32 = arith.constant 0 : i32
    %c0_i32_0 = arith.constant 0 : i32
    %c0_i32_1 = arith.constant 0 : i32
    return %c0_i32, %c0_i32_0 : i32, i32
  }
  func.func @transform_7(%arg0: i32) -> (i32, i32) {
    %c0_i32 = arith.constant 0 : i32
    %c0_i32_0 = arith.constant 0 : i32
    %c0_i32_1 = arith.constant 0 : i32
    return %c0_i32, %c0_i32_0 : i32, i32
  }
  func.func @transform_8(%arg0: i32) -> (i32, i32) {
    %c0_i32 = arith.constant 0 : i32
    %c0_i32_0 = arith.constant 0 : i32
    %c0_i32_1 = arith.constant 0 : i32
    return %c0_i32, %c0_i32_0 : i32, i32
  }
  func.func @transform_9(%arg0: i32) -> (i32, i32) {
    %c0_i32 = arith.constant 0 : i32
    %c0_i32_0 = arith.constant 0 : i32
    return %arg0, %c0_i32 : i32, i32
  }
  func.func @transform_10(%arg0: i32) -> (i32, i32) {
    %c0_i32 = arith.constant 0 : i32
    %c0_i32_0 = arith.constant 0 : i32
    return %arg0, %c0_i32 : i32, i32
  }
  func.func @transform_11(%arg0: i32) -> (i32, i32) {
    %c0_i32 = arith.constant 0 : i32
    %c0_i32_0 = arith.constant 0 : i32
    return %arg0, %c0_i32 : i32, i32
  }
}

</mosaic_0001>

<llo_original>
// kernel: tpu_custom_call.1
$region0: #{tpu_custom_call.1}
  #allocation0 [shape = 'u32[]', space=smem, size = 0x4, offset = 0x4, fixed_abs, tag = 'smem constant byte address 0x4 - core index']
  #allocation1 [shape = 'u32[72,128]{1,0:T(1,128)}', space=vmem, size = 0x9000, scoped, tag = 'internal scratch']
  %s0 = inlined_call_operand.hbm [shape: f32[16,32], index: 0, kind: input, shape index: {}]
  %s1 = inlined_call_operand.hbm [shape: f32[16,32], index: 1, kind: input, shape index: {}]
  %s2 = inlined_call_operand.hbm [shape: f32[16,32], index: 2, kind: input, shape index: {}]
  %s3 = inlined_call_operand.hbm [shape: bf16[32,32], index: 3, kind: input, shape index: {}]
  %s4 = inlined_call_operand.hbm [shape: bf16[32,32], index: 4, kind: input, shape index: {}]
  %s5 = inlined_call_operand.hbm [shape: bf16[32,32], index: 5, kind: input, shape index: {}]
  %s6 = inlined_call_operand.vmem [shape: f32[1,32], index: 6, kind: input, shape index: {}]
  %s7 = inlined_call_operand.vmem [shape: f32[1,32], index: 7, kind: input, shape index: {}]
  %s8 = inlined_call_operand.vmem [shape: f32[1,32], index: 8, kind: input, shape index: {}]
  %s9 = inlined_call_operand.hbm [shape: bf16[16,32], index: 9, kind: output, shape index: {0}]
  %s10 = inlined_call_operand.hbm [shape: bf16[16,32], index: 10, kind: output, shape index: {1}]
  %s11 = inlined_call_operand.hbm [shape: bf16[16,32], index: 11, kind: output, shape index: {2}]
  %12 = xla_tuple %s9, %s10, %s11
  %s13 = sld [smem:[#allocation0]]
  $region86: #{tpu_custom_call.1} parent=0
    _
  %s15 = ssub.s32 1, %s13
  %s16 = scalar_select 0, %s15, %s13
  $region1: #{tpu_custom_call.1} parent=0
    #allocation2 [shape = 'u8[8192]{0}', space=vmem, size = 0x2000, scoped, tag = 'input window, operand 0, single buffered']
    #allocation3 [shape = 's32[1]{0}', space=sflag, size = 0x4, scoped, tag = 'scoped memory for tpu_custom_call.1']
    #allocation4 [shape = 's32[1]{0}', space=sflag, size = 0x4, scoped, tag = 'scoped memory for tpu_custom_call.1']
    #allocation5 [shape = 'u8[8192]{0}', space=vmem, size = 0x2000, scoped, tag = 'input window, operand 1, single buffered']
    #allocation6 [shape = 's32[1]{0}', space=sflag, size = 0x4, scoped, tag = 'scoped memory for tpu_custom_call.1']
    #allocation7 [shape = 'u8[8192]{0}', space=vmem, size = 0x2000, scoped, tag = 'input window, operand 2, single buffered']
    #allocation8 [shape = 'u8[8192]{0}', space=vmem, size = 0x2000, scoped, tag = 'input window, operand 3, single buffered']
    #allocation9 [shape = 's32[1]{0}', space=sflag, size = 0x4, scoped, tag = 'scoped memory for tpu_custom_call.1']
    #allocation10 [shape = 'u8[8192]{0}', space=vmem, size = 0x2000, scoped, tag = 'input window, operand 4, single buffered']
    #allocation11 [shape = 'u8[8192]{0}', space=vmem, size = 0x2000, scoped, tag = 'input window, operand 5, single buffered']
    #allocation12 [shape = 's32[1]{0}', space=sflag, size = 0x4, scoped, tag = 'scoped memory for tpu_custom_call.1']
    #allocation13 [shape = 'u8[4096]{0}', space=vmem, size = 0x1000, scoped, tag = 'output window, operand 0, single buffered']
    #allocation14 [shape = 'u8[4096]{0}', space=vmem, size = 0x1000, scoped, tag = 'output window, operand 1, single buffered']
    #allocation15 [shape = 's32[1]{0}', space=sflag, size = 0x4, scoped, tag = 'scoped memory for tpu_custom_call.1']
    #allocation16 [shape = 'u8[4096]{0}', space=vmem, size = 0x1000, scoped, tag = 'output window, operand 2, single buffered']
    %17 = vsyncpa [#allocation3], 0
    %18 = vsyncpa [#allocation6], 0
    %19 = vsyncpa [#allocation9], 0
    %20 = vsyncpa [#allocation12], 0
    %21 = vsyncpa [#allocation4], 0
    %22 = vsyncpa [#allocation15], 0
    // Predicated region
    $region2: #{tpu_custom_call.1} parent=1 // pred_check
      _
    $region3: #{tpu_custom_call.1} parent=1 // pred_check_branch
      %24 = sbr.rel (0) target = $region5
    $region4: #{tpu_custom_call.1} parent=1 // pred_region
      %26 = vsyncadd [#allocation3], 0
      %s27 = sshll.u32 %s0, 4
      %s28 = int_to_ptr.hbm [resolvable:$true] %s27
      %s29 = sshll.u32 [#allocation2], 4
      %s30 = int_to_ptr.vmem [resolvable:$true] %s29
      %35 = dma.hbm_to_vmem [thread:$0]  %s28, 256, %s30, [#allocation3], 128, 128, 8
    $region5: #{tpu_custom_call.1} parent=1 // pred_fallthru
      _
    // Predicated region
    $region6: #{tpu_custom_call.1} parent=1 // pred_check
      _
    $region7: #{tpu_custom_call.1} parent=1 // pred_check_branch
      %37 = sbr.rel (0) target = $region9
    $region8: #{tpu_custom_call.1} parent=1 // pred_region
      %39 = vsyncadd [#allocation6], 0
      %s40 = sshll.u32 %s1, 4
      %s41 = int_to_ptr.hbm [resolvable:$true] %s40
      %s42 = sshll.u32 [#allocation5], 4
      %s43 = int_to_ptr.vmem [resolvable:$true] %s42
      %48 = dma.hbm_to_vmem [thread:$0]  %s41, 256, %s43, [#allocation6], 128, 128, 8
    $region9: #{tpu_custom_call.1} parent=1 // pred_fallthru
      _
    // Predicated region
    $region10: #{tpu_custom_call.1} parent=1 // pred_check
      _
    $region11: #{tpu_custom_call.1} parent=1 // pred_check_branch
      %50 = sbr.rel (0) target = $region13
    $region12: #{tpu_custom_call.1} parent=1 // pred_region
      %52 = vsyncadd [#allocation6], 0
      %s53 = sshll.u32 %s2, 4
      %s54 = int_to_ptr.hbm [resolvable:$true] %s53
      %s55 = sshll.u32 [#allocation7], 4
      %s56 = int_to_ptr.vmem [resolvable:$true] %s55
      %61 = dma.hbm_to_vmem [thread:$0]  %s54, 256, %s56, [#allocation6], 128, 128, 8
    $region13: #{tpu_custom_call.1} parent=1 // pred_fallthru
      _
    // Predicated region
    $region14: #{tpu_custom_call.1} parent=1 // pred_check
      _
    $region15: #{tpu_custom_call.1} parent=1 // pred_check_branch
      %63 = sbr.rel (0) target = $region17
    $region16: #{tpu_custom_call.1} parent=1 // pred_region
      %65 = vsyncadd [#allocation9], 0
      %s66 = sshll.u32 %s3, 4
      %s67 = int_to_ptr.hbm [resolvable:$true] %s66
      %s68 = sshll.u32 [#allocation8], 4
      %s69 = int_to_ptr.vmem [resolvable:$true] %s68
      %74 = dma.hbm_to_vmem [thread:$0]  %s67, 256, %s69, [#allocation9], 64, 64, 4
    $region17: #{tpu_custom_call.1} parent=1 // pred_fallthru
      _
    // Predicated region
    $region18: #{tpu_custom_call.1} parent=1 // pred_check
      _
    $region19: #{tpu_custom_call.1} parent=1 // pred_check_branch
      %76 = sbr.rel (0) target = $region21
    $region20: #{tpu_custom_call.1} parent=1 // pred_region
      %78 = vsyncadd [#allocation9], 0
      %s79 = sshll.u32 %s4, 4
      %s80 = int_to_ptr.hbm [resolvable:$true] %s79
      %s81 = sshll.u32 [#allocation10], 4
      %s82 = int_to_ptr.vmem [resolvable:$true] %s81
      %87 = dma.hbm_to_vmem [thread:$0]  %s80, 256, %s82, [#allocation9], 64, 64, 4
    $region21: #{tpu_custom_call.1} parent=1 // pred_fallthru
      _
    // Predicated region
    $region22: #{tpu_custom_call.1} parent=1 // pred_check
      _
    $region23: #{tpu_custom_call.1} parent=1 // pred_check_branch
      %89 = sbr.rel (0) target = $region25
    $region24: #{tpu_custom_call.1} parent=1 // pred_region
      %91 = vsyncadd [#allocation12], 0
      %s92 = sshll.u32 %s5, 4
      %s93 = int_to_ptr.hbm [resolvable:$true] %s92
      %s94 = sshll.u32 [#allocation11], 4
      %s95 = int_to_ptr.vmem [resolvable:$true] %s94
      %100 = dma.hbm_to_vmem [thread:$0]  %s93, 256, %s95, [#allocation12], 64, 64, 4
    $region25: #{tpu_custom_call.1} parent=1 // pred_fallthru
      _
    // Predicated region
    $region26: #{tpu_custom_call.1} parent=1 // pred_check
      _
    $region27: #{tpu_custom_call.1} parent=1 // pred_check_branch
      %102 = sbr.rel (0) target = $region29
    $region28: #{tpu_custom_call.1} parent=1 // pred_region
      _
    $region29: #{tpu_custom_call.1} parent=1 // pred_fallthru
      _
    // Predicated region
    $region30: #{tpu_custom_call.1} parent=1 // pred_check
      _
    $region31: #{tpu_custom_call.1} parent=1 // pred_check_branch
      %104 = sbr.rel (0) target = $region33
    $region32: #{tpu_custom_call.1} parent=1 // pred_region
      _
    $region33: #{tpu_custom_call.1} parent=1 // pred_fallthru
      _
    // Predicated region
    $region34: #{tpu_custom_call.1} parent=1 // pred_check
      _
    $region35: #{tpu_custom_call.1} parent=1 // pred_check_branch
      %106 = sbr.rel (0) target = $region37
    $region36: #{tpu_custom_call.1} parent=1 // pred_region
      _
    $region37: #{tpu_custom_call.1} parent=1 // pred_fallthru
      _
    // Predicated region
    $region38: #{tpu_custom_call.1} parent=1 // pred_check
      _
    $region39: #{tpu_custom_call.1} parent=1 // pred_check_branch
      %108 = sbr.rel (0) target = $region41
    $region40: #{tpu_custom_call.1} parent=1 // pred_region
      %110 = dma.done [#allocation3], 256
    $region41: #{tpu_custom_call.1} parent=1 // pred_fallthru
      _
    // Predicated region
    $region42: #{tpu_custom_call.1} parent=1 // pred_check
      _
    $region43: #{tpu_custom_call.1} parent=1 // pred_check_branch
      %112 = sbr.rel (0) target = $region45
    $region44: #{tpu_custom_call.1} parent=1 // pred_region
      %114 = dma.done [#allocation6], 256
    $region45: #{tpu_custom_call.1} parent=1 // pred_fallthru
      _
    // Predicated region
    $region46: #{tpu_custom_call.1} parent=1 // pred_check
      _
    $region47: #{tpu_custom_call.1} parent=1 // pred_check_branch
      %116 = sbr.rel (0) target = $region49
    $region48: #{tpu_custom_call.1} parent=1 // pred_region
      %118 = dma.done [#allocation6], 256
    $region49: #{tpu_custom_call.1} parent=1 // pred_fallthru
      _
    // Predicated region
    $region50: #{tpu_custom_call.1} parent=1 // pred_check
      _
    $region51: #{tpu_custom_call.1} parent=1 // pred_check_branch
      %120 = sbr.rel (0) target = $region53
    $region52: #{tpu_custom_call.1} parent=1 // pred_region
      %122 = dma.done [#allocation9], 256
    $region53: #{tpu_custom_call.1} parent=1 // pred_fallthru
      _
    // Predicated region
    $region54: #{tpu_custom_call.1} parent=1 // pred_check
      _
    $region55: #{tpu_custom_call.1} parent=1 // pred_check_branch
      %124 = sbr.rel (0) target = $region57
    $region56: #{tpu_custom_call.1} parent=1 // pred_region
      %126 = dma.done [#allocation9], 256
    $region57: #{tpu_custom_call.1} parent=1 // pred_fallthru
      _
    // Predicated region
    $region58: #{tpu_custom_call.1} parent=1 // pred_check
      _
    $region59: #{tpu_custom_call.1} parent=1 // pred_check_branch
      %128 = sbr.rel (0) target = $region61
    $region60: #{tpu_custom_call.1} parent=1 // pred_region
      %130 = dma.done [#allocation12], 256
    $region61: #{tpu_custom_call.1} parent=1 // pred_fallthru
      _
    %v132 = vld [vmem:[#allocation2] sm:$0xff]
    %v133 = vld [vmem:[#allocation2 + $0x8] sm:$0xff]
    %v134 = vpack.c.bf16 %v133, %v132
    %v135 = vld [vmem:[#allocation8] sm:$0xf]
    %v136 = vld [vmem:[#allocation8 + $0x4] sm:$0xf]
    %v137 = vld [vmem:[#allocation8 + $0x8] sm:$0xf]
    %v138 = vld [vmem:[#allocation8 + $0xc] sm:$0xf]
    %v139 = vld [vmem:[%s6] sm:$0x1]
    %v141 = vperm.slane %v139, 0
    %v147 = vunpack.c.l.b16 %v135
    %v148 = vunpack.c.l.b16 %v136
    %v149 = vunpack.c.l.b16 %v137
    %v150 = vunpack.c.l.b16 %v138
    %v151 = vpack.c.b16 %v148, %v147
    %v152 = vpack.c.b16 %v150, %v149
    %vm155 = vcmask 261120
    %v157 = vsel %vm155, %v134, 0
    %159 = vmatpush.bf16.msra.mxu0 0
    %160 = vmatpush.bf16.msra.mxu0 0
    %161 = vmatpush.bf16.msra.mxu0 0
    %162 = vmatpush.bf16.msra.mxu0 0
    %163 = vmatpush.bf16.msra.mxu0 0
    %164 = vmatpush.bf16.msra.mxu0 0
    %165 = vmatpush.bf16.msra.mxu0 %v152
    %166 = vmatpush.bf16.msra.mxu0 %v151
    %167 = vmatmul.bf16.gmra.mxu0 %v157
    %v168 = vpop.f32.mrf.mxu0
    %v169 = vadd.f32 %v141, %v168
    %v170 = vpop.f32.mrf.mxu0
    %v171 = vadd.f32 %v141, %v170
    %172 = vdwg.mxu0
    %v173 = vpack.c.bf16 %v169, %v169
    %v174 = vpack.c.bf16 %v171, %v171
    %vm175 = vcmask 257024
    %176 = vst.msk [vmem:[#allocation13] sm:$0xf] %vm175, %v173
    %177 = vst.msk [vmem:[#allocation13 + $0x4] sm:$0xf] %vm175, %v174
    %v178 = vld [vmem:[#allocation5] sm:$0xff]
    %v179 = vld [vmem:[#allocation5 + $0x8] sm:$0xff]
    %v180 = vpack.c.bf16 %v179, %v178
    %v181 = vld [vmem:[#allocation10] sm:$0xf]
    %v182 = vld [vmem:[#allocation10 + $0x4] sm:$0xf]
    %v183 = vld [vmem:[#allocation10 + $0x8] sm:$0xf]
    %v184 = vld [vmem:[#allocation10 + $0xc] sm:$0xf]
    %v185 = vld [vmem:[%s7] sm:$0x1]
    %v187 = vperm.slane %v185, 0
    %v193 = vunpack.c.l.b16 %v181
    %v194 = vunpack.c.l.b16 %v182
    %v195 = vunpack.c.l.b16 %v183
    %v196 = vunpack.c.l.b16 %v184
    %v197 = vpack.c.b16 %v194, %v193
    %v198 = vpack.c.b16 %v196, %v195
    %v202 = vsel %vm155, %v180, 0
    %204 = vmatpush.bf16.msra.mxu0 0
    %205 = vmatpush.bf16.msra.mxu0 0
    %206 = vmatpush.bf16.msra.mxu0 0
    %207 = vmatpush.bf16.msra.mxu0 0
    %208 = vmatpush.bf16.msra.mxu0 0
    %209 = vmatpush.bf16.msra.mxu0 0
    %210 = vmatpush.bf16.msra.mxu0 %v198
    %211 = vmatpush.bf16.msra.mxu0 %v197
    %212 = vmatmul.bf16.gmra.mxu0 %v202
    %v213 = vpop.f32.mrf.mxu0
    %v214 = vadd.f32 %v187, %v213
    %v215 = vpop.f32.mrf.mxu0
    %v216 = vadd.f32 %v187, %v215
    %217 = vdwg.mxu0
    %v218 = vpack.c.bf16 %v214, %v214
    %v219 = vpack.c.bf16 %v216, %v216
    %220 = vst.msk [vmem:[#allocation14] sm:$0xf] %vm175, %v218
    %221 = vst.msk [vmem:[#allocation14 + $0x4] sm:$0xf] %vm175, %v219
    %v222 = vld [vmem:[#allocation7] sm:$0xff]
    %v223 = vld [vmem:[#allocation7 + $0x8] sm:$0xff]
    %v224 = vpack.c.bf16 %v223, %v222
    %v225 = vld [vmem:[#allocation11] sm:$0xf]
    %v226 = vld [vmem:[#allocation11 + $0x4] sm:$0xf]
    %v227 = vld [vmem:[#allocation11 + $0x8] sm:$0xf]
    %v228 = vld [vmem:[#allocation11 + $0xc] sm:$0xf]
    %v229 = vld [vmem:[%s8] sm:$0x1]
    %v231 = vperm.slane %v229, 0
    %v237 = vunpack.c.l.b16 %v225
    %v238 = vunpack.c.l.b16 %v226
    %v239 = vunpack.c.l.b16 %v227
    %v240 = vunpack.c.l.b16 %v228
    %v241 = vpack.c.b16 %v238, %v237
    %v242 = vpack.c.b16 %v240, %v239
    %v246 = vsel %vm155, %v224, 0
    %248 = vmatpush.bf16.msra.mxu0 0
    %249 = vmatpush.bf16.msra.mxu0 0
    %250 = vmatpush.bf16.msra.mxu0 0
    %251 = vmatpush.bf16.msra.mxu0 0
    %252 = vmatpush.bf16.msra.mxu0 0
    %253 = vmatpush.bf16.msra.mxu0 0
    %254 = vmatpush.bf16.msra.mxu0 %v242
    %255 = vmatpush.bf16.msra.mxu0 %v241
    %256 = vmatmul.bf16.gmra.mxu0 %v246
    %v257 = vpop.f32.mrf.mxu0
    %v258 = vadd.f32 %v231, %v257
    %v259 = vpop.f32.mrf.mxu0
    %v260 = vadd.f32 %v231, %v259
    %261 = vdwg.mxu0
    %v262 = vpack.c.bf16 %v258, %v258
    %v263 = vpack.c.bf16 %v260, %v260
    %264 = vst.msk [vmem:[#allocation16] sm:$0xf] %vm175, %v262
    %265 = vst.msk [vmem:[#allocation16 + $0x4] sm:$0xf] %vm175, %v263
    // Predicated region
    $region62: #{tpu_custom_call.1} parent=1 // pred_check
      _
    $region63: #{tpu_custom_call.1} parent=1 // pred_check_branch
      %267 = sbr.rel (0) target = $region65
    $region64: #{tpu_custom_call.1} parent=1 // pred_region
      %269 = vsyncadd [#allocation4], 0
      %s270 = sshll.u32 [#allocation13], 4
      %s271 = int_to_ptr.vmem [resolvable:$true] %s270
      %s272 = sshll.u32 %s9, 4
      %s273 = int_to_ptr.hbm [resolvable:$true] %s272
      %278 = dma.vmem_to_hbm [thread:$0]  %s271, 128, %s273, [#allocation4], 64, 64, 4
    $region65: #{tpu_custom_call.1} parent=1 // pred_fallthru
      _
    // Predicated region
    $region66: #{tpu_custom_call.1} parent=1 // pred_check
      _
    $region67: #{tpu_custom_call.1} parent=1 // pred_check_branch
      %280 = sbr.rel (0) target = $region69
    $region68: #{tpu_custom_call.1} parent=1 // pred_region
      %282 = vsyncadd [#allocation15], 0
      %s283 = sshll.u32 [#allocation14], 4
      %s284 = int_to_ptr.vmem [resolvable:$true] %s283
      %s285 = sshll.u32 %s10, 4
      %s286 = int_to_ptr.hbm [resolvable:$true] %s285
      %291 = dma.vmem_to_hbm [thread:$0]  %s284, 128, %s286, [#allocation15], 64, 64, 4
    $region69: #{tpu_custom_call.1} parent=1 // pred_fallthru
      _
    // Predicated region
    $region70: #{tpu_custom_call.1} parent=1 // pred_check
      _
    $region71: #{tpu_custom_call.1} parent=1 // pred_check_branch
      %293 = sbr.rel (0) target = $region73
    $region72: #{tpu_custom_call.1} parent=1 // pred_region
      %295 = vsyncadd [#allocation15], 0
      %s296 = sshll.u32 [#allocation16], 4
      %s297 = int_to_ptr.vmem [resolvable:$true] %s296
      %s298 = sshll.u32 %s11, 4
      %s299 = int_to_ptr.hbm [resolvable:$true] %s298
      %304 = dma.vmem_to_hbm [thread:$0]  %s297, 128, %s299, [#allocation15], 64, 64, 4
    $region73: #{tpu_custom_call.1} parent=1 // pred_fallthru
      _
    // Predicated region
    $region74: #{tpu_custom_call.1} parent=1 // pred_check
      _
    $region75: #{tpu_custom_call.1} parent=1 // pred_check_branch
      %306 = sbr.rel (0) target = $region77
    $region76: #{tpu_custom_call.1} parent=1 // pred_region
      %308 = dma.done [#allocation4], 128
    $region77: #{tpu_custom_call.1} parent=1 // pred_fallthru
      _
    // Predicated region
    $region78: #{tpu_custom_call.1} parent=1 // pred_check
      _
    $region79: #{tpu_custom_call.1} parent=1 // pred_check_branch
      %310 = sbr.rel (0) target = $region81
    $region80: #{tpu_custom_call.1} parent=1 // pred_region
      %312 = dma.done [#allocation15], 128
    $region81: #{tpu_custom_call.1} parent=1 // pred_fallthru
      _
    // Predicated region
    $region82: #{tpu_custom_call.1} parent=1 // pred_check
      _
    $region83: #{tpu_custom_call.1} parent=1 // pred_check_branch
      %314 = sbr.rel (0) target = $region85
    $region84: #{tpu_custom_call.1} parent=1 // pred_region
      %316 = dma.done [#allocation15], 128
    $region85: #{tpu_custom_call.1} parent=1 // pred_fallthru
      _
    %317 = vsyncpa [#allocation3], 1
    %318 = vsyncpa [#allocation6], 1
    %319 = vsyncpa [#allocation9], 1
    %320 = vsyncpa [#allocation12], 1
    %321 = vsyncpa [#allocation4], 1
    %322 = vsyncpa [#allocation15], 1

</llo_original>
